<compile_context>
chip_gen: v5e
topology: v5e:2x2
jax: 0.10.0
libtpu: 0.0.40
codegen_flags: <defaults>
</compile_context>

<pallas_src>
import functools

import jax
import jax.numpy as jnp
from jax import lax
from jax.experimental import pallas as pl
from jax.experimental.pallas import tpu as pltpu


# ---------------------------------------------------------------------------
# Helpers
# ---------------------------------------------------------------------------
def _round_up(x, m):
    return ((x + m - 1) // m) * m


def _vmem_limit_bytes():
    """Per-chip scoped-VMEM budget: v7x has 64 MiB physical, v5e/v6e 128 MiB."""
    try:
        kind = jax.devices()[0].device_kind.lower()
    except Exception:
        kind = ""
    if ("v5" in kind) or ("v6" in kind):
        return 64 * 1024 * 1024
    return 48 * 1024 * 1024          # safe on v7x (64 MiB physical) / unknown chips


def _pick_tile_n(n, bytes_per_row, budget_bytes, cap=16384):
    """Rows per node tile: as large as the double-buffered input budget allows."""
    if n <= 128:
        return n                                     # single block == full node dim
    t = budget_bytes // (2 * bytes_per_row)          # x2: double-buffered pipeline
    t = max(128, min(cap, (t // 128) * 128))         # lane/sublane aligned
    return min(t, (n // 128) * 128)                  # never exceed the array extent


def _pick_d_split(d):
    # Extra "parallel" grid axis over the feature dim -> both v7x TensorCores get
    # independent work when D is wide enough; harmless single block otherwise.
    if d >= 256 and d % 256 == 0:
        return 2
    return 1


# ---------------------------------------------------------------------------
# Kernels — global pooling (no node types)
# ---------------------------------------------------------------------------
def _global_sum_kernel(feat_ref, out_ref, acc_ref, *, tile_n, n_valid, scale):
    k = pl.program_id(1)

    @pl.when(k == 0)
    def _init():
        acc_ref[...] = jnp.zeros_like(acc_ref)

    x = feat_ref[...].astype(jnp.float32)                               # (tile_n, td)
    row = k * tile_n + lax.broadcasted_iota(jnp.int32, (tile_n, 1), 0)
    x = jnp.where(row < n_valid, x, 0.0)                                # ragged tail -> 0
    if tile_n % 8 == 0:
        # Sublane-preserving partial sums: pure VALU adds per tile.
        acc_ref[...] += jnp.sum(x.reshape(tile_n // 8, 8, x.shape[-1]), axis=0)
    else:
        part = jnp.sum(x, axis=0, keepdims=True)                        # (1, td)
        sub = lax.broadcasted_iota(jnp.int32, (8, 1), 0)
        acc_ref[...] += jnp.where(sub == 0, part, 0.0)

    @pl.when(k == pl.num_programs(1) - 1)
    def _finalize():
        # Single cross-sublane (XLU) reduce, only at the end.
        out_ref[...] = jnp.sum(acc_ref[...], axis=0, keepdims=True) * scale


def _global_max_kernel(feat_ref, out_ref, acc_ref, *, tile_n, n_valid):
    k = pl.program_id(1)

    @pl.when(k == 0)
    def _init():
        acc_ref[...] = jnp.full_like(acc_ref, -jnp.inf)

    x = feat_ref[...].astype(jnp.float32)
    row = k * tile_n + lax.broadcasted_iota(jnp.int32, (tile_n, 1), 0)
    x = jnp.where(row < n_valid, x, -jnp.inf)                           # ragged tail -> -inf
    if tile_n % 8 == 0:
        acc_ref[...] = jnp.maximum(
            acc_ref[...], jnp.max(x.reshape(tile_n // 8, 8, x.shape[-1]), axis=0))
    else:
        part = jnp.max(x, axis=0, keepdims=True)
        sub = lax.broadcasted_iota(jnp.int32, (8, 1), 0)
        acc_ref[...] = jnp.maximum(acc_ref[...], jnp.where(sub == 0, part, -jnp.inf))

    @pl.when(k == pl.num_programs(1) - 1)
    def _finalize():
        # TODO(synk): PyTorch's `feat.max(0, keepdim=True)` also returns indices;
        # we return only the values.
        out_ref[...] = jnp.max(acc_ref[...], axis=0, keepdims=True)


# ---------------------------------------------------------------------------
# Kernels — per-type pooling
# ---------------------------------------------------------------------------
def _typed_matmul_kernel(types_ref, feat_ref, scale_ref, out_ref, acc_ref, *,
                         tile_n, n_valid, t_pad):
    """sum/mean: in-kernel pre-transposed one-hot @ feat on the MXU, per tile."""
    k = pl.program_id(1)

    @pl.when(k == 0)
    def _init():
        acc_ref[...] = jnp.zeros_like(acc_ref)

    x = feat_ref[...].astype(jnp.float32)                               # (tile_n, td)
    row = k * tile_n + lax.broadcasted_iota(jnp.int32, (tile_n, 1), 0)
    x = jnp.where(row < n_valid, x, 0.0)                                # ragged tail -> 0

    # One-hot built in-kernel (never touches HBM), already transposed: lane-dense
    # types row vs sublane iota -> (t_pad, tile_n); plain A @ B is MXU-native.
    types_row = types_ref[...]                                          # (1, tile_n) int32
    t_iota = lax.broadcasted_iota(jnp.int32, (t_pad, 1), 0)
    onehot_t = (types_row == t_iota).astype(jnp.float32)                # (t_pad, tile_n)

    acc_ref[...] += jnp.dot(onehot_t, x, preferred_element_type=jnp.float32)

    @pl.when(k == pl.num_programs(1) - 1)
    def _finalize():
        # scale = 1 for 'sum', 1/max(count, 1) for 'mean' (empty types stay 0).
        out_ref[...] = acc_ref[...] * scale_ref[...]


def _typed_max_kernel(types_ref, feat_ref, presence_ref, out_ref, acc_ref, *,
                      tile_n, n_valid, n_types, t_pad):
    """max: all node types handled while the feature tile is live; one dense acc update."""
    k = pl.program_id(1)

    @pl.when(k == 0)
    def _init():
        acc_ref[...] = jnp.full_like(acc_ref, -jnp.inf)

    x = feat_ref[...].astype(jnp.float32)                               # (tile_n, td)
    row = k * tile_n + lax.broadcasted_iota(jnp.int32, (tile_n, 1), 0)
    x = jnp.where(row < n_valid, x, -jnp.inf)                           # ragged tail -> -inf
    types = types_ref[...]                                              # (tile_n, 1) int32
    t_iota = lax.broadcasted_iota(jnp.int32, (t_pad, 1), 0)

    tile_max = jnp.full((t_pad, x.shape[-1]), -jnp.inf, jnp.float32)
    for t in range(n_types):                                            # static unroll, T small
        row_max = jnp.max(jnp.where(types == t, x, -jnp.inf), axis=0, keepdims=True)
        tile_max = jnp.where(t_iota == t, row_max, tile_max)
    acc_ref[...] = jnp.maximum(acc_ref[...], tile_max)                  # single dense write

    @pl.when(k == pl.num_programs(1) - 1)
    def _finalize():
        # Empty types (and t_pad padding rows) -> zeros, matching torch.zeros.
        out_ref[...] = jnp.where(presence_ref[...] > 0.0, acc_ref[...], 0.0)


# ---------------------------------------------------------------------------
# Wrapper (JAX/Pallas equivalent of Pooling.forward)
# ---------------------------------------------------------------------------
def pooling_forward(feat, node_types=None, n_types=None, *, pooler="mean", tile_n=None):
    """feat: float[N, D]; node_types: int32[N] (graph.ndata['type']); n_types: int|None."""
    feat = jnp.asarray(feat)
    if not jnp.issubdtype(feat.dtype, jnp.floating):
        feat = feat.astype(jnp.float32)
    N, D = feat.shape
    item = jnp.dtype(feat.dtype).itemsize

    vmem_limit = _vmem_limit_bytes()
    budget = vmem_limit // 2                       # double-buffered input streams
    n_d = _pick_d_split(D)
    td = D // n_d
    compiler_params = pltpu.CompilerParams(
        dimension_semantics=("parallel", "arbitrary"),   # feat-dim parallel, node-dim reduce
        vmem_limit_bytes=vmem_limit,
    )

    # ----------------------- global pooling path -----------------------
    if not n_types:
        tn = _pick_tile_n(N, D * item, budget) if tile_n is None else tile_n
        assert tn % 128 == 0 or tn == N
        n_tiles = pl.cdiv(N, tn)
        cost = pl.CostEstimate(flops=N * D, transcendentals=0,
                               bytes_accessed=N * D * item + D * 4)

        if pooler in ("mean", "sum"):
            scale = (1.0 / N) if pooler == "mean" else 1.0
            kernel = functools.partial(_global_sum_kernel, tile_n=tn, n_valid=N, scale=scale)
        elif pooler == "max":
            kernel = functools.partial(_global_max_kernel, tile_n=tn, n_valid=N)
        else:
            raise NotImplementedError(pooler)

        return pl.pallas_call(
            kernel,
            out_shape=jax.ShapeDtypeStruct((1, D), jnp.float32),
            grid=(n_d, n_tiles),
            in_specs=[pl.BlockSpec((tn, td), lambda j, k: (k, j))],
            out_specs=pl.BlockSpec((1, td), lambda j, k: (0, j)),
            scratch_shapes=[pltpu.VMEM((8, td), jnp.float32)],
            compiler_params=compiler_params,
            cost_estimate=cost,
        )(feat)

    # ------------------------ per-type pooling path ---------------------
    t_pad = _round_up(n_types, 8)                                       # sublane-dense slab
    types = jnp.asarray(node_types, jnp.int32)
    cnt = jnp.bincount(types, length=t_pad).astype(jnp.float32)         # per-type counts

    if pooler in ("mean", "sum"):
        # types streamed lane-dense as a (1, N) row -> tiny, dense DMA.
        tn = _pick_tile_n(N, D * item + 4, budget) if tile_n is None else tile_n
        assert tn % 128 == 0 or tn == N
        n_tiles = pl.cdiv(N, tn)
        if pooler == "mean":
            scale = (1.0 / jnp.maximum(cnt, 1.0)).reshape(t_pad, 1).astype(jnp.float32)
        else:
            scale = jnp.ones((t_pad, 1), jnp.float32)
        cost = pl.CostEstimate(flops=2 * N * t_pad * D, transcendentals=0,
                               bytes_accessed=N * D * item + N * 4 + t_pad * D * 4)
        per_type = pl.pallas_call(
            functools.partial(_typed_matmul_kernel, tile_n=tn, n_valid=N, t_pad=t_pad),
            out_shape=jax.ShapeDtypeStruct((t_pad, D), jnp.float32),
            grid=(n_d, n_tiles),
            in_specs=[
                pl.BlockSpec((1, tn), lambda j, k: (0, k)),      # lane-dense type-id row
                pl.BlockSpec((tn, td), lambda j, k: (k, j)),     # feature node tile
                pl.BlockSpec((t_pad, 1), lambda j, k: (0, 0)),   # per-type scale
            ],
            out_specs=pl.BlockSpec((t_pad, td), lambda j, k: (0, j)),
            scratch_shapes=[pltpu.VMEM((t_pad, td), jnp.float32)],
            compiler_params=compiler_params,
            cost_estimate=cost,
        )(types.reshape(1, N), feat, scale)
    elif pooler == "max":
        # Per-row masks need type ids along the sublane axis -> (N, 1) block.
        # It lane-pads to 128 lanes in VMEM, so budget it as 128 extra f32 cols.
        tn = _pick_tile_n(N, D * item + 128 * 4, budget) if tile_n is None else tile_n
        assert tn % 128 == 0 or tn == N
        n_tiles = pl.cdiv(N, tn)
        presence = (cnt > 0.0).astype(jnp.float32).reshape(t_pad, 1)
        cost = pl.CostEstimate(flops=2 * N * D * n_types, transcendentals=0,
                               bytes_accessed=N * D * item + N * 4 + t_pad * D * 4)
        per_type = pl.pallas_call(
            functools.partial(_typed_max_kernel, tile_n=tn, n_valid=N,
                              n_types=n_types, t_pad=t_pad),
            out_shape=jax.ShapeDtypeStruct((t_pad, D), jnp.float32),
            grid=(n_d, n_tiles),
            in_specs=[
                pl.BlockSpec((tn, 1), lambda j, k: (k, 0)),      # per-node type ids
                pl.BlockSpec((tn, td), lambda j, k: (k, j)),     # feature node tile
                pl.BlockSpec((t_pad, 1), lambda j, k: (0, 0)),   # per-type presence
            ],
            out_specs=pl.BlockSpec((t_pad, td), lambda j, k: (0, j)),
            scratch_shapes=[pltpu.VMEM((t_pad, td), jnp.float32)],
            compiler_params=compiler_params,
            cost_estimate=cost,
        )(types.reshape(N, 1), feat, presence)
    else:
        raise NotImplementedError(pooler)

    # (t_pad, D) slab -> keep real types, concatenate along the feature dim.
    return per_type[:n_types].reshape(1, n_types * D)


# ---------------------------------------------------------------------------
# Reference (plain jnp) used for a correctness check
# ---------------------------------------------------------------------------
def _reference(feat, node_types, n_types, pooler):
    if not n_types:
        if pooler == "mean":
            return feat.mean(0, keepdims=True)
        if pooler == "sum":
            return feat.sum(0, keepdims=True)
        if pooler == "max":
            return feat.max(0, keepdims=True)
        raise NotImplementedError
    outs = []
    for i in range(n_types):
        mask = node_types == i
        rows = feat[mask]
        if rows.shape[0] == 0:
            outs.append(jnp.zeros((1, feat.shape[-1]), jnp.float32))
        elif pooler == "mean":
            outs.append(rows.mean(0, keepdims=True))
        elif pooler == "sum":
            outs.append(rows.sum(0, keepdims=True))
        elif pooler == "max":
            outs.append(rows.max(0, keepdims=True))
        else:
            raise NotImplementedError
    return jnp.concatenate(outs, axis=-1)


# ---------------------------------------------------------------------------
if __name__ == "__main__":
    key = jax.random.PRNGKey(0)
    k_feat, k_type = jax.random.split(key)

    N, D, T = 200, 128, 3                 # 200 nodes, 128-dim features, 3 types
    TILE_N = 128                          # forces a 2-step grid + ragged (masked) tail
    feat = jax.random.normal(k_feat, (N, D), dtype=jnp.float32)
    # Only types {0, 1} present -> type 2 is empty (exercises the zeros path).
    node_types = jax.random.randint(k_type, (N,), 0, 2, dtype=jnp.int32)

    ok = True
    for pooler in ("mean", "sum", "max"):
        # Branch 1: no n_types -> global pooling over all nodes.
        ref_g = _reference(feat, node_types, None, pooler)
        out_g = jax.block_until_ready(pooling_forward(feat, pooler=pooler, tile_n=TILE_N))
        ok &= bool(jnp.allclose(out_g, ref_g, atol=1e-4, rtol=1e-4))
        assert out_g.shape == (1, D)
        out_g_auto = jax.block_until_ready(pooling_forward(feat, pooler=pooler))
        ok &= bool(jnp.allclose(out_g_auto, ref_g, atol=1e-4, rtol=1e-4))

        # Branch 2: per-type pooling concatenated along the feature dim.
        ref_t = _reference(feat, node_types, T, pooler)
        out_t = jax.block_until_ready(
            pooling_forward(feat, node_types, T, pooler=pooler, tile_n=TILE_N))
        ok &= bool(jnp.allclose(out_t, ref_t, atol=1e-4, rtol=1e-4))
        assert out_t.shape == (1, T * D)

        # Also exercise the automatic tile-size path.
        out_auto = jax.block_until_ready(pooling_forward(feat, node_types, T, pooler=pooler))
        ok &= bool(jnp.allclose(out_auto, ref_t, atol=1e-4, rtol=1e-4))

    if not ok:
        raise SystemExit("mismatch vs reference")
    print("KERNEL_OK")
</pallas_src>

<mosaic_0001>
module attributes {stable_mosaic.version = 11 : i64} {
  func.func @_global_sum_kernel(%arg0: i32, %arg1: i32, %arg2: memref<128x128xf32, #tpu.memory_space<vmem>>, %arg3: memref<1x128xf32, #tpu.memory_space<vmem>>, %arg4: memref<8x128xf32, #tpu.memory_space<vmem>>) attributes {dimension_semantics = [#tpu.dimension_semantics<parallel>, #tpu.dimension_semantics<arbitrary>], iteration_bounds = array<i64: 1, 2>, scalar_prefetch = 0 : i64, scratch_operands = 1 : i64, tpu.core_type = #tpu.core_type<tc>, window_params = [{transform_indices = @transform_0, window_bounds = array<i64: 128, 128>}, {transform_indices = @transform_1, window_bounds = array<i64: 1, 128>}]} {
    %c0_i32 = arith.constant 0 : i32
    %0 = arith.cmpi eq, %arg1, %c0_i32 : i32
    %1 = arith.extui %0 : i1 to i32
    %c0_i32_0 = arith.constant 0 : i32
    %2 = arith.cmpi ne, %1, %c0_i32_0 : i32
    scf.if %2 {
      %cst_8 = arith.constant 0.000000e+00 : f32
      %22 = vector.broadcast %cst_8 : f32 to vector<8x128xf32>
      %c0_9 = arith.constant 0 : index
      %c0_10 = arith.constant 0 : index
      %23 = vector.load %arg4[%c0_9, %c0_10] : memref<8x128xf32, #tpu.memory_space<vmem>>, vector<8x128xf32>
      tpu.vector_store %arg4[%c0_9, %c0_10], %22 {strides = array<i32>} : memref<8x128xf32, #tpu.memory_space<vmem>>, vector<8x128xf32>,
    } else {
    }
    %c0 = arith.constant 0 : index
    %c0_1 = arith.constant 0 : index
    %3 = vector.load %arg2[%c0, %c0_1] : memref<128x128xf32, #tpu.memory_space<vmem>>, vector<128x128xf32>
    %c128_i32 = arith.constant 128 : i32
    %4 = arith.muli %arg1, %c128_i32 : i32
    %5 = tpu.iota {dimensions = array<i32: 0>} : vector<128x1xi32>
    %6 = vector.broadcast %4 : i32 to vector<128x1xi32>
    %7 = arith.addi %6, %5 : vector<128x1xi32>
    %c200_i32 = arith.constant 200 : i32
    %8 = vector.broadcast %c200_i32 : i32 to vector<128x1xi32>
    %9 = arith.cmpi slt, %7, %8 : vector<128x1xi32>
    %cst = arith.constant 0.000000e+00 : f32
    %10 = vector.shape_cast %9 : vector<128x1xi1> to vector<128x1xi1>
    %11 = vector.broadcast %10 : vector<128x1xi1> to vector<128x128xi1>
    %12 = vector.broadcast %cst : f32 to vector<128x128xf32>
    %13 = arith.select %11, %3, %12 : vector<128x128xi1>, vector<128x128xf32>
    %c0_2 = arith.constant 0 : index
    %c0_3 = arith.constant 0 : index
    %14 = vector.load %arg4[%c0_2, %c0_3] : memref<8x128xf32, #tpu.memory_space<vmem>>, vector<8x128xf32>
    %15 = vector.shape_cast %13 : vector<128x128xf32> to vector<16x8x128xf32>
    %cst_4 = arith.constant dense<0.000000e+00> : vector<8x128xf32>
    %16 = vector.multi_reduction <add>, %15, %cst_4 [0] : vector<16x8x128xf32> to vector<8x128xf32>
    %17 = arith.addf %14, %16 : vector<8x128xf32>
    %c0_5 = arith.constant 0 : index
    %c0_6 = arith.constant 0 : index
    %18 = vector.load %arg4[%c0_5, %c0_6] : memref<8x128xf32, #tpu.memory_space<vmem>>, vector<8x128xf32>
    tpu.vector_store %arg4[%c0_5, %c0_6], %17 {strides = array<i32>} : memref<8x128xf32, #tpu.memory_space<vmem>>, vector<8x128xf32>,
    %c1_i32 = arith.constant 1 : i32
    %19 = arith.cmpi eq, %arg1, %c1_i32 : i32
    %20 = arith.extui %19 : i1 to i32
    %c0_i32_7 = arith.constant 0 : i32
    %21 = arith.cmpi ne, %20, %c0_i32_7 : i32
    scf.if %21 {
      %c0_8 = arith.constant 0 : index
      %c0_9 = arith.constant 0 : index
      %22 = vector.load %arg4[%c0_8, %c0_9] : memref<8x128xf32, #tpu.memory_space<vmem>>, vector<8x128xf32>
      %cst_10 = arith.constant dense<0.000000e+00> : vector<128xf32>
      %23 = vector.multi_reduction <add>, %22, %cst_10 [0] : vector<8x128xf32> to vector<128xf32>
      %24 = vector.shape_cast %23 : vector<128xf32> to vector<1x128xf32>
      %cst_11 = arith.constant 5.000000e-03 : f32
      %25 = vector.broadcast %cst_11 : f32 to vector<1x128xf32>
      %26 = arith.mulf %24, %25 : vector<1x128xf32>
      %c0_12 = arith.constant 0 : index
      %c0_13 = arith.constant 0 : index
      %27 = vector.load %arg3[%c0_12, %c0_13] : memref<1x128xf32, #tpu.memory_space<vmem>>, vector<1x128xf32>
      tpu.vector_store %arg3[%c0_12, %c0_13], %26 {strides = array<i32>} : memref<1x128xf32, #tpu.memory_space<vmem>>, vector<1x128xf32>,
    } else {
    }
    return
  }
  func.func @transform_0(%arg0: i32, %arg1: i32) -> (i32, i32) {
    %c0_i32 = arith.constant 0 : i32
    return %arg1, %arg0 : i32, i32
  }
  func.func @transform_1(%arg0: i32, %arg1: i32) -> (i32, i32) {
    %c0_i32 = arith.constant 0 : i32
    %c0_i32_0 = arith.constant 0 : i32
    return %c0_i32, %arg0 : i32, i32
  }
}

</mosaic_0001>

<llo_original>
// kernel: tpu_custom_call.1
$region0: #{tpu_custom_call.1}
  #allocation0 [shape = 'u32[]', space=smem, size = 0x4, offset = 0x4, fixed_abs, tag = 'smem constant byte address 0x4 - core index']
  #allocation1 [shape = 'u32[72,128]{1,0:T(1,128)}', space=vmem, size = 0x9000, scoped, tag = 'internal scratch']
  #allocation2 [shape = 'f32[8,128]{1,0:T(8,128)}', space=vmem, size = 0x1000, scoped, tag = 'scratch operand']
  %s0 = inlined_call_operand.hbm [shape: f32[200,128], index: 0, kind: input, shape index: {}]
  %s1 = inlined_call_operand.hbm [shape: f32[1,128], index: 1, kind: output, shape index: {}]
  %s2 = sld [smem:[#allocation0]]
  $region49: #{tpu_custom_call.1} parent=0
    _
  %s4 = ssub.s32 1, %s2
  %s5 = scalar_select 0, %s4, %s2
  $region1: #{tpu_custom_call.1} parent=0
    #allocation3 [shape = 'u8[131072]{0}', space=vmem, size = 0x20000, scoped, tag = 'input window, operand 0']
    #allocation4 [shape = 's32[2]{0}', space=sflag, size = 0x8, scoped, tag = 'scoped memory for tpu_custom_call.1']
    #allocation5 [shape = 's32[2]{0}', space=sflag, size = 0x8, scoped, tag = 'scoped memory for tpu_custom_call.1']
    #allocation6 [shape = 'u8[512]{0}', space=vmem, size = 0x400, scoped, tag = 'output window, operand 0, single buffered']
    %6 = vsyncpa [#allocation4], 0
    %s7 = scalar_lea.sflag [#allocation4], 1
    %8 = vsyncpa %s7, 0
    %9 = vsyncpa [#allocation5], 0
    loop: start=0, step=1, limit=4
    $region2: #{tpu_custom_call.1} parent=1 // loop_pre_header
      _
    $region3: #{tpu_custom_call.1} parent=1 // loop_header
      %s11 = sphi 0, %s15
      %p12 = scmp.ge.s32.totalorder %s11, 4
      %s18 = sphi 0, %s30
      %s19 = sphi 0, %s26
      %s20 = sphi 0, %s18
      %s21 = sphi 0, %s19
      %s22 = sphi 0, %s20
      %s23 = sphi 0, %s21
      %s35 = sphi 0, %s37
      %s38 = sphi 0, %s35
      %s39 = sphi 0, %s38
      %s55 = sphi 0, %s39
      %s61 = sphi 0, %s63
      %s64 = sphi 0, %s61
      %s65 = sphi 0, %s64
      %s81 = sphi 0, %s65
    $region4: #{tpu_custom_call.1} parent=1 // loop_header_branch
      %14 = sbr.rel (%p12) target = $region8
    $region5: #{tpu_custom_call.1} parent=1 // loop_body
      %s16 = ssub.s32 %s11, 1
      %s17 = ssub.s32 %s11, 2
      %s24 = sadd.s32 1, %s19
      %p25 = scmp.ge.s32.totalorder %s24, 2
      %s26 = scalar_select %p25, 0, %s24
      %s27 = sadd.s32 1, %s18
      %s28 = scalar_select %p25, %s27, %s18
      %p29 = scmp.ge.s32.totalorder %s28, 1
      %s30 = scalar_select %p29, 0, %s28
      %s31 = ssub.s32 %s19, %s26
      %s32 = ssub.s32 %s18, %s30
      %s33 = sor.u32 %s31, %s32
      %p34 = scmp.eq.s32.totalorder %s33, 0
      %s36 = sadd.s32 %s35, 1
      %s37 = scalar_select %p34, %s35, %s36
      %p40 = pneg %p34
      %p41 = scmp.eq.s32.totalorder %s11, 1
      %p42 = por %p40, %p41
      %p43 = scmp.ne.s32.totalorder %s35, %s38
      %p44 = scmp.eq.s32.totalorder %s11, 0
      %p45 = por %p43, %p44
      %p46 = scmp.ne.s32.totalorder %s35, %s38
      %p47 = scmp.eq.s32.totalorder %s16, 1
      %p48 = por %p46, %p47
      %p49 = scmp.ne.s32.totalorder %s38, %s39
      %p50 = scmp.eq.s32.totalorder %s16, 0
      %p51 = por %p49, %p50
      %p52 = scmp.ne.s32.totalorder %s38, %s39
      %p53 = scmp.eq.s32.totalorder %s17, 1
      %p54 = por %p52, %p53
      %p56 = scmp.ne.s32.totalorder %s39, %s55
      %p57 = scmp.eq.s32.totalorder %s17, 0
      %p58 = por %p56, %p57
      %s59 = ssub.s32 %s18, %s30
      %p60 = scmp.eq.s32.totalorder %s59, 0
      %s62 = sadd.s32 %s61, 1
      %s63 = scalar_select %p60, %s61, %s62
      %p66 = pneg %p60
      %p67 = scmp.eq.s32.totalorder %s11, 1
      %p68 = por %p66, %p67
      %p69 = scmp.ne.s32.totalorder %s61, %s64
      %p70 = scmp.eq.s32.totalorder %s11, 0
      %p71 = por %p69, %p70
      %p72 = scmp.ne.s32.totalorder %s61, %s64
      %p73 = scmp.eq.s32.totalorder %s16, 1
      %p74 = por %p72, %p73
      %p75 = scmp.ne.s32.totalorder %s64, %s65
      %p76 = scmp.eq.s32.totalorder %s16, 0
      %p77 = por %p75, %p76
      %p78 = scmp.ne.s32.totalorder %s64, %s65
      %p79 = scmp.eq.s32.totalorder %s17, 1
      %p80 = por %p78, %p79
      %p82 = scmp.ne.s32.totalorder %s65, %s81
      %p83 = scmp.eq.s32.totalorder %s17, 0
      %p84 = por %p82, %p83
      %p85 = scmp.le.s32.totalorder 1, %s11
      %p86 = scmp.lt.s32.totalorder %s11, 3
      %p87 = pnand %p85, %p86
      %p88 = pneg %p87
      // Predicated region
      $region9: #{tpu_custom_call.1} parent=5 // pred_check
        _
      $region10: #{tpu_custom_call.1} parent=5 // pred_check_branch
        %90 = sbr.rel (%p87) target = $region12
      $region11: #{tpu_custom_call.1} parent=5 // pred_region
        %s91 = ssub.s32 %s11, 1
      $region12: #{tpu_custom_call.1} parent=5 // pred_fallthru
        _
      %p92 = scmp.lt.s32.totalorder %s11, 2
      // Predicated region
      $region13: #{tpu_custom_call.1} parent=5 // pred_check
        %p93 = pneg %p92
      $region14: #{tpu_custom_call.1} parent=5 // pred_check_branch
        %95 = sbr.rel (%p93) target = $region16
      $region15: #{tpu_custom_call.1} parent=5 // pred_region
        // Predicated region
        $region17: #{tpu_custom_call.1} parent=15 // pred_check
          %p96 = pneg %p45
        $region18: #{tpu_custom_call.1} parent=15 // pred_check_branch
          %98 = sbr.rel (%p96) target = $region20
        $region19: #{tpu_custom_call.1} parent=15 // pred_region
          %s99 = sand.u32 %s35, 1
          %s100 = scalar_lea.sflag [#allocation4], %s99
          %s101 = sand.u32 %s35, 1
          %s102 = smul.addr %s101, 128
          %s103 = scalar_lea.vmem [#allocation3], %s102
          %s104 = smul.u32 16, %s19
          %s105 = ssub.s32 25, %s104
          %p106 = scmp.lt.s32.totalorder %s105, 16
          %s107 = scalar_select %p106, %s105, 16
          %s108 = smul.u32 8, %s107
          %s109 = ssub.s32 128, %s108
          %s110 = sshll.u32 %s109, 4
          %111 = vsyncadd %s100, %s110
          %p112 = scmp.ne.s32.totalorder 0, %s108
          %s113 = sadd.s32 %s18, %s104
          %s114 = smul.addr %s113, 8
          %s115 = scalar_lea.hbm %s0, %s114
          %s116 = smul.u32 8, %s107
          %s117 = sshll.u32 %s115, 4
          %s118 = int_to_ptr.hbm [resolvable:$true] %s117
          %s119 = sshll.u32 %s103, 4
          %s120 = int_to_ptr.vmem [resolvable:$true] %s119
          %s121 = sshll.u32 %s116, 4
          %125 = dma.hbm_to_vmem [thread:$0]  (%p112), %s118, %s121, %s120, %s100, 128, 128, 8
        $region20: #{tpu_custom_call.1} parent=15 // pred_fallthru
          _
      $region16: #{tpu_custom_call.1} parent=5 // pred_fallthru
        _
      %p126 = scmp.le.s32.totalorder 1, %s11
      %p127 = scmp.lt.s32.totalorder %s11, 3
      %p128 = pnand %p126, %p127
      %p129 = pneg %p128
      // Predicated region
      $region21: #{tpu_custom_call.1} parent=5 // pred_check
        _
      $region22: #{tpu_custom_call.1} parent=5 // pred_check_branch
        %131 = sbr.rel (%p128) target = $region24
      $region23: #{tpu_custom_call.1} parent=5 // pred_region
        %s132 = ssub.s32 %s11, 1
        %s133 = sand.u32 %s38, 1
        %s134 = scalar_lea.sflag [#allocation4], %s133
        %s135 = sand.u32 %s38, 1
        %s136 = smul.addr %s135, 128
        %s137 = scalar_lea.vmem [#allocation3], %s136
        // Predicated region
        $region25: #{tpu_custom_call.1} parent=23 // pred_check
          %p138 = pneg %p51
        $region26: #{tpu_custom_call.1} parent=23 // pred_check_branch
          %140 = sbr.rel (%p138) target = $region28
        $region27: #{tpu_custom_call.1} parent=23 // pred_region
          %142 = dma.done %s134, 2048
        $region28: #{tpu_custom_call.1} parent=23 // pred_fallthru
          _
        %s143 = sand.u32 %s38, 1
        %s144 = scalar_lea.sflag [#allocation4], %s143
        %s145 = sand.u32 %s38, 1
        %s146 = smul.addr %s145, 128
        %s147 = scalar_lea.vmem [#allocation3], %s146
        %p148 = pneg %p51
        %p149 = pneg %p48
        %p150 = pneg %p77
        %p151 = pneg %p74
        %s152 = smul.u32 16, %s21
        %s153 = ssub.s32 25, %s152
        %p154 = scmp.lt.s32.totalorder %s153, 16
        %s155 = scalar_select %p154, %s153, 16
        %s156 = smul.u32 8, %s155
        %p157 = scmp.eq.s32.totalorder %s21, 0
        // Predicated region
        $region29: #{tpu_custom_call.1} parent=23 // pred_check
          %p158 = pneg %p157
        $region30: #{tpu_custom_call.1} parent=23 // pred_check_branch
          %160 = sbr.rel (%p158) target = $region32
        $region31: #{tpu_custom_call.1} parent=23 // pred_region
          %161 = vst [vmem:[#allocation2] sm:$0xff] 0.0
        $region32: #{tpu_custom_call.1} parent=23 // pred_fallthru
          _
        %v162 = vld [vmem:[%s137] sm:$0xff]
        %v163 = vld [vmem:[%s137 + $0x8] sm:$0xff]
        %v164 = vld [vmem:[%s137 + $0x10] sm:$0xff]
        %v165 = vld [vmem:[%s137 + $0x18] sm:$0xff]
        %v166 = vld [vmem:[%s137 + $0x20] sm:$0xff]
        %v167 = vld [vmem:[%s137 + $0x28] sm:$0xff]
        %v168 = vld [vmem:[%s137 + $0x30] sm:$0xff]
        %v169 = vld [vmem:[%s137 + $0x38] sm:$0xff]
        %v170 = vld [vmem:[%s137 + $0x40] sm:$0xff]
        %v171 = vld [vmem:[%s137 + $0x48] sm:$0xff]
        %v172 = vld [vmem:[%s137 + $0x50] sm:$0xff]
        %v173 = vld [vmem:[%s137 + $0x58] sm:$0xff]
        %v174 = vld [vmem:[%s137 + $0x60] sm:$0xff]
        %v175 = vld [vmem:[%s137 + $0x68] sm:$0xff]
        %v176 = vld [vmem:[%s137 + $0x70] sm:$0xff]
        %v177 = vld [vmem:[%s137 + $0x78] sm:$0xff]
        %s178 = smul.u32 %s21, 128
        %v179 = vlaneseq
        %v180 = vshrl.u32 %v179, 7
        %v181 = vadd.s32 %v180, 8
        %v182 = vadd.s32 %v180, 16
        %v183 = vadd.s32 %v180, 24
        %v184 = vadd.s32 %v180, 32
        %v185 = vadd.s32 %v180, 40
        %v186 = vadd.s32 %v180, 48
        %v187 = vadd.s32 %v180, 56
        %v188 = vadd.s32 %v180, 64
        %v189 = vadd.s32 %v180, 72
        %v190 = vadd.s32 %v180, 80
        %v191 = vadd.s32 %v180, 88
        %v192 = vadd.s32 %v180, 96
        %v193 = vadd.s32 %v180, 104
        %v194 = vadd.s32 %v180, 112
        %v195 = vadd.s32 %v180, 120
        %v196 = vstv %s178
        %v197 = vadd.s32 %v196, %v180
        %v198 = vadd.s32 %v196, %v181
        %v199 = vadd.s32 %v196, %v182
        %v200 = vadd.s32 %v196, %v183
        %v201 = vadd.s32 %v196, %v184
        %v202 = vadd.s32 %v196, %v185
        %v203 = vadd.s32 %v196, %v186
        %v204 = vadd.s32 %v196, %v187
        %v205 = vadd.s32 %v196, %v188
        %v206 = vadd.s32 %v196, %v189
        %v207 = vadd.s32 %v196, %v190
        %v208 = vadd.s32 %v196, %v191
        %v209 = vadd.s32 %v196, %v192
        %v210 = vadd.s32 %v196, %v193
        %v211 = vadd.s32 %v196, %v194
        %v212 = vadd.s32 %v196, %v195
        %vm213 = vcmp.lt.s32.totalorder %v197, 200
        %vm214 = vcmp.lt.s32.totalorder %v198, 200
        %vm215 = vcmp.lt.s32.totalorder %v199, 200
        %vm216 = vcmp.lt.s32.totalorder %v200, 200
        %vm217 = vcmp.lt.s32.totalorder %v201, 200
        %vm218 = vcmp.lt.s32.totalorder %v202, 200
        %vm219 = vcmp.lt.s32.totalorder %v203, 200
        %vm220 = vcmp.lt.s32.totalorder %v204, 200
        %vm221 = vcmp.lt.s32.totalorder %v205, 200
        %vm222 = vcmp.lt.s32.totalorder %v206, 200
        %vm223 = vcmp.lt.s32.totalorder %v207, 200
        %vm224 = vcmp.lt.s32.totalorder %v208, 200
        %vm225 = vcmp.lt.s32.totalorder %v209, 200
        %vm226 = vcmp.lt.s32.totalorder %v210, 200
        %vm227 = vcmp.lt.s32.totalorder %v211, 200
        %vm228 = vcmp.lt.s32.totalorder %v212, 200
        %v229 = vsel %vm213, 1, 0
        %v230 = vsel %vm214, 1, 0
        %v231 = vsel %vm215, 1, 0
        %v232 = vsel %vm216, 1, 0
        %v233 = vsel %vm217, 1, 0
        %v234 = vsel %vm218, 1, 0
        %v235 = vsel %vm219, 1, 0
        %v236 = vsel %vm220, 1, 0
        %v237 = vsel %vm221, 1, 0
        %v238 = vsel %vm222, 1, 0
        %v239 = vsel %vm223, 1, 0
        %v240 = vsel %vm224, 1, 0
        %v241 = vsel %vm225, 1, 0
        %v242 = vsel %vm226, 1, 0
        %v243 = vsel %vm227, 1, 0
        %v244 = vsel %vm228, 1, 0
        %vm245 = vcmp.eq.s32.totalorder %v229, 1
        %vm246 = vcmp.eq.s32.totalorder %v230, 1
        %vm247 = vcmp.eq.s32.totalorder %v231, 1
        %vm248 = vcmp.eq.s32.totalorder %v232, 1
        %vm249 = vcmp.eq.s32.totalorder %v233, 1
        %vm250 = vcmp.eq.s32.totalorder %v234, 1
        %vm251 = vcmp.eq.s32.totalorder %v235, 1
        %vm252 = vcmp.eq.s32.totalorder %v236, 1
        %vm253 = vcmp.eq.s32.totalorder %v237, 1
        %vm254 = vcmp.eq.s32.totalorder %v238, 1
        %vm255 = vcmp.eq.s32.totalorder %v239, 1
        %vm256 = vcmp.eq.s32.totalorder %v240, 1
        %vm257 = vcmp.eq.s32.totalorder %v241, 1
        %vm258 = vcmp.eq.s32.totalorder %v242, 1
        %vm259 = vcmp.eq.s32.totalorder %v243, 1
        %vm260 = vcmp.eq.s32.totalorder %v244, 1
        %v261 = vsel %vm245, %v162, 0.0
        %v262 = vsel %vm246, %v163, 0.0
        %v263 = vsel %vm247, %v164, 0.0
        %v264 = vsel %vm248, %v165, 0.0
        %v265 = vsel %vm249, %v166, 0.0
        %v266 = vsel %vm250, %v167, 0.0
        %v267 = vsel %vm251, %v168, 0.0
        %v268 = vsel %vm252, %v169, 0.0
        %v269 = vsel %vm253, %v170, 0.0
        %v270 = vsel %vm254, %v171, 0.0
        %v271 = vsel %vm255, %v172, 0.0
        %v272 = vsel %vm256, %v173, 0.0
        %v273 = vsel %vm257, %v174, 0.0
        %v274 = vsel %vm258, %v175, 0.0
        %v275 = vsel %vm259, %v176, 0.0
        %v276 = vsel %vm260, %v177, 0.0
        %v277 = vld [vmem:[#allocation2] sm:$0xff]
        %v278 = vadd.f32 %v261, %v262
        %v279 = vadd.f32 %v278, %v263
        %v280 = vadd.f32 %v279, %v264
        %v281 = vadd.f32 %v280, %v265
        %v282 = vadd.f32 %v281, %v266
        %v283 = vadd.f32 %v282, %v267
        %v284 = vadd.f32 %v283, %v268
        %v285 = vadd.f32 %v284, %v269
        %v286 = vadd.f32 %v285, %v270
        %v287 = vadd.f32 %v286, %v271
        %v288 = vadd.f32 %v287, %v272
        %v289 = vadd.f32 %v288, %v273
        %v290 = vadd.f32 %v289, %v274
        %v291 = vadd.f32 %v290, %v275
        %v292 = vadd.f32 %v291, %v276
        %v293 = vadd.f32 %v277, %v292
        %294 = vst [vmem:[#allocation2] sm:$0xff] %v293
        %p295 = scmp.eq.s32.totalorder %s21, 1
        // Predicated region
        $region33: #{tpu_custom_call.1} parent=23 // pred_check
          %p296 = pneg %p295
        $region34: #{tpu_custom_call.1} parent=23 // pred_check_branch
          %298 = sbr.rel (%p296) target = $region36
        $region35: #{tpu_custom_call.1} parent=23 // pred_region
          %v299 = vld [vmem:[#allocation2] sm:$0xff]
          %v300 = vrot.slane %v299, 4
          %v301 = vadd.f32 %v299, %v300
          %v302 = vrot.slane %v301, 2
          %v303 = vadd.f32 %v301, %v302
          %v304 = vrot.slane %v303, 1
          %v305 = vadd.f32 %v303, %v304
          %v306 = vmul.f32 %v305, 0.005
          %307 = vst [vmem:[#allocation6] sm:$0x1] %v306
        $region36: #{tpu_custom_call.1} parent=23 // pred_fallthru
          _
        // Predicated region
        $region37: #{tpu_custom_call.1} parent=23 // pred_check
          %p308 = pneg %p74
        $region38: #{tpu_custom_call.1} parent=23 // pred_check_branch
          %310 = sbr.rel (%p308) target = $region40
        $region39: #{tpu_custom_call.1} parent=23 // pred_region
          %312 = vsyncadd [#allocation5], 0
          %s313 = scalar_lea.hbm %s1, %s20
          %s315 = sshll.u32 [#allocation6], 4
          %s316 = int_to_ptr.vmem [resolvable:$true] %s315
          %s317 = sshll.u32 %s313, 4
          %s318 = int_to_ptr.hbm [resolvable:$true] %s317
          %320 = dma.vmem_to_hbm [thread:$0]  %s316, 16, %s318, [#allocation5]
        $region40: #{tpu_custom_call.1} parent=23 // pred_fallthru
          _
        // Predicated region
        $region41: #{tpu_custom_call.1} parent=23 // pred_check
          %p321 = pneg %p74
        $region42: #{tpu_custom_call.1} parent=23 // pred_check_branch
          %323 = sbr.rel (%p321) target = $region44
        $region43: #{tpu_custom_call.1} parent=23 // pred_region
          %325 = dma.done [#allocation5], 16
        $region44: #{tpu_custom_call.1} parent=23 // pred_fallthru
          _
      $region24: #{tpu_custom_call.1} parent=5 // pred_fallthru
        _
      %p326 = scmp.le.s32.totalorder 2, %s11
      // Predicated region
      $region45: #{tpu_custom_call.1} parent=5 // pred_check
        %p327 = pneg %p326
      $region46: #{tpu_custom_call.1} parent=5 // pred_check_branch
        %329 = sbr.rel (%p327) target = $region48
      $region47: #{tpu_custom_call.1} parent=5 // pred_region
        %s330 = ssub.s32 %s11, 2
      $region48: #{tpu_custom_call.1} parent=5 // pred_fallthru
        _
    $region6: #{tpu_custom_call.1} parent=1 // loop_footer
      %s15 = sadd.s32 1, %s11
    $region7: #{tpu_custom_call.1} parent=1 // loop_footer_branch
      %10 = sbr.rel target = $region3
    $region8: #{tpu_custom_call.1} parent=1 // loop_exit
      _
    %331 = vsyncpa [#allocation4], 1
    %s332 = scalar_lea.sflag [#allocation4], 1
    %333 = vsyncpa %s332, 1
    %334 = vsyncpa [#allocation5], 1
    %s335 = scalar_lea.sflag [#allocation5], 1
    %336 = vsyncpa %s335, 1

</llo_original>
